<compile_context>
chip_gen: v5e
topology: v5e:2x2
jax: 0.10.0
libtpu: 0.0.40
codegen_flags: <defaults>
</compile_context>

<pallas_src>
import jax
import jax.numpy as jnp
from jax.experimental import pallas as pl
from jax.experimental.pallas import tpu as pltpu


_LANE = 128


# ----------------------------- Pallas kernel ------------------------------- #
def _make_kernel(r):
    """One example per grid step; the example's signal is (r, 128) = (T//128, 128)."""

    def kernel(x_ref, n_ref, h_ref, c_ref, o_ref):
        # x_ref / n_ref / o_ref : (1, r, 128) f32   signal / pre-shaped noise / out
        # h_ref                 : (1, 3, 128, 128) bf16   banded FIR blocks (Hm, H0, Hp)
        # c_ref                 : (1, 1, 128) f32   lane 0 = p_acn * 10^(-snr_db/20)
        x = x_ref[0]                                       # (r, 128)
        n = n_ref[0]                                       # (r, 128)
        coef = c_ref[0][:, 0:1]                            # (1, 1)

        # ---- AddColoredNoise: rescale the pre-shaped noise to the drawn SNR ----
        inv_cnt = 1.0 / float(r * _LANE)
        sig_p = jnp.sum(jnp.sum(x * x, axis=1, keepdims=True),
                        axis=0, keepdims=True) * inv_cnt    # (1, 1)
        noi_p = jnp.sum(jnp.sum(n * n, axis=1, keepdims=True),
                        axis=0, keepdims=True) * inv_cnt    # (1, 1)
        scale = coef * jnp.sqrt(sig_p / (noi_p + 1e-12))     # (1, 1)
        xn = x + scale * n                                   # (r, 128)

        # ---- fused HPF∘LPF∘Gain 'same' FIR as three MXU matmuls ----------------
        # out_row_r = X_{r-1} @ Hm + X_r @ H0 + X_{r+1} @ Hp  (zero rows at ends)
        if r > 1:
            zrow = jnp.zeros((1, _LANE), xn.dtype)
            x_prev = jnp.concatenate([zrow, xn[:-1, :]], axis=0)
            x_next = jnp.concatenate([xn[1:, :], zrow], axis=0)
        else:
            x_prev = jnp.zeros_like(xn)
            x_next = jnp.zeros_like(xn)

        am = x_prev.astype(jnp.bfloat16)
        a0 = xn.astype(jnp.bfloat16)
        ap = x_next.astype(jnp.bfloat16)

        y = jnp.dot(am, h_ref[0, 0], preferred_element_type=jnp.float32)
        y = y + jnp.dot(a0, h_ref[0, 1], preferred_element_type=jnp.float32)
        y = y + jnp.dot(ap, h_ref[0, 2], preferred_element_type=jnp.float32)
        o_ref[0] = y.astype(o_ref.dtype)

    return kernel


def waveform_augment_pallas(xz, nz, hmat, coef):
    """xz/nz: (B, R, 128) f32; hmat: (B, 3, 128, 128) bf16; coef: (B, 1, 128) f32."""
    b, r, lane = xz.shape
    assert lane == _LANE

    return pl.pallas_call(
        _make_kernel(r),
        out_shape=jax.ShapeDtypeStruct((b, r, lane), jnp.float32),
        grid=(b,),
        in_specs=[
            pl.BlockSpec((1, r, lane), lambda i: (i, 0, 0)),
            pl.BlockSpec((1, r, lane), lambda i: (i, 0, 0)),
            pl.BlockSpec((1, 3, lane, lane), lambda i: (i, 0, 0, 0)),
            pl.BlockSpec((1, 1, lane), lambda i: (i, 0, 0)),
        ],
        out_specs=pl.BlockSpec((1, r, lane), lambda i: (i, 0, 0)),
        compiler_params=pltpu.CompilerParams(
            dimension_semantics=("parallel",),   # examples independent; B grid steps
        ),
    )(xz, nz, hmat, coef)


# ------------------------------ JAX glue ----------------------------------- #
def _lowpass_taps(cutoff_hz, sr, K):
    """Hamming-windowed sinc lowpass FIR taps, per example. cutoff_hz: (B,)."""
    m = jnp.arange(K, dtype=jnp.float32) - (K - 1) / 2.0
    fc = (cutoff_hz / sr)[:, None]
    h = 2.0 * fc * jnp.sinc(2.0 * fc * m[None, :])
    win = 0.54 - 0.46 * jnp.cos(
        2.0 * jnp.pi * jnp.arange(K, dtype=jnp.float32) / (K - 1))
    h = h * win[None, :]
    return h / jnp.sum(h, axis=1, keepdims=True)


def _band_matrices(taps, half):
    """taps: (B, 2*half+1) -> (B, 3, 128, 128) banded-Toeplitz blocks (Hm, H0, Hp).

    H_s[i, j] = taps[i - j + half + 128*s] for s in {-1, 0, +1} (0 outside the band).
    """
    kf = 2 * half + 1
    idx = jnp.arange(_LANE)
    d0 = idx[:, None] - idx[None, :]                 # i - j

    def band(shift):
        k = d0 + half + shift
        valid = (k >= 0) & (k < kf)
        kk = jnp.clip(k, 0, kf - 1)
        return jnp.where(valid[None, :, :], taps[:, kk], 0.0)

    return jnp.stack([band(-_LANE), band(0), band(_LANE)], axis=1)


def waveform_augmentation(wav, key, sr=16000, K=31):
    """wav: (B, T) float32 -> augmented (B, T) float32."""
    B, T = wav.shape
    keys = jax.random.split(key, 10)

    # --- per-example random parameters (matching the module's ranges) -------
    p_acn = jax.random.bernoulli(keys[0], 0.5, (B,))
    snr_db = jax.random.uniform(keys[1], (B,), minval=10.0, maxval=40.0)
    f_decay = jax.random.uniform(keys[2], (B,), minval=-2.0, maxval=2.0)
    p_hpf = jax.random.bernoulli(keys[3], 0.5, (B,))
    hpf_cut = jax.random.uniform(keys[4], (B,), minval=20.0, maxval=2400.0)
    p_lpf = jax.random.bernoulli(keys[5], 0.5, (B,))
    lpf_cut = jax.random.uniform(keys[6], (B,), minval=150.0, maxval=7500.0)
    p_gain = jax.random.bernoulli(keys[7], 0.75, (B,))
    gain_db = jax.random.uniform(keys[8], (B,), minval=-12.0, maxval=12.0)

    # --- 1/f^decay colored noise (FFT spectral shaping in the glue; its
    #     absolute scale is irrelevant, the kernel rescales it to the SNR) ----
    white = jax.random.normal(keys[9], (B, T), dtype=jnp.float32)
    spec = jnp.fft.rfft(white, axis=-1)
    freqs = jnp.fft.rfftfreq(T, d=1.0 / sr)
    shaping = jnp.where(
        freqs[None, :] > 0.0,
        jnp.power(jnp.maximum(freqs[None, :], 1e-9), -f_decay[:, None] / 2.0),
        0.0)
    noise = jnp.fft.irfft(spec * shaping, n=T, axis=-1).astype(jnp.float32)

    # --- FIR taps: identity (delta) when a filter is not applied ------------
    delta = jnp.zeros((K,), jnp.float32).at[(K - 1) // 2].set(1.0)
    lp_for_hpf = _lowpass_taps(hpf_cut, sr, K)
    hp_taps = (-lp_for_hpf).at[:, (K - 1) // 2].add(1.0)       # spectral inversion
    lp_taps = _lowpass_taps(lpf_cut, sr, K)
    hpf_taps = jnp.where(p_hpf[:, None], hp_taps, delta[None, :])
    lpf_taps = jnp.where(p_lpf[:, None], lp_taps, delta[None, :])

    # --- fuse HPF∘LPF into one (2K-1)-tap filter, fold the gain in ----------
    kf = 2 * K - 1
    half = (kf - 1) // 2
    assert half < _LANE, "banded 3-block decomposition needs half < 128"
    fused = jax.vmap(lambda a, b: jnp.convolve(a, b, mode="full"))(hpf_taps, lpf_taps)
    gain_lin = jnp.where(p_gain, jnp.power(10.0, gain_db / 20.0), 1.0)
    fused = fused * gain_lin[:, None]

    hmat = _band_matrices(fused, half).astype(jnp.bfloat16)     # (B, 3, 128, 128)

    noise_coef = p_acn.astype(jnp.float32) * jnp.power(10.0, -snr_db / 20.0)
    coef = jnp.zeros((B, 1, _LANE), jnp.float32).at[:, 0, 0].set(noise_coef)

    # --- lay the time axis out as (T//128, 128) rows -------------------------
    # TODO(synk): if T is not a multiple of 128 the trailing zero pad slightly
    # biases the in-kernel signal/noise power means (SNR) for that example.
    tp = ((T + _LANE - 1) // _LANE) * _LANE
    r = tp // _LANE
    xz = jnp.pad(wav.astype(jnp.float32), ((0, 0), (0, tp - T))).reshape(B, r, _LANE)
    nz = jnp.pad(noise, ((0, 0), (0, tp - T))).reshape(B, r, _LANE)

    out = waveform_augment_pallas(xz, nz, hmat, coef)
    return out.reshape(B, tp)[:, :T]              # (B, T), mirrors squeeze(1)


# --------------------------------- main ------------------------------------ #
if __name__ == "__main__":
    key = jax.random.PRNGKey(0)
    k_wav, k_aug = jax.random.split(key)

    B, T = 4, 1024                    # small deterministic example
    wav = jax.random.normal(k_wav, (B, T), dtype=jnp.float32) * 0.1

    out = waveform_augmentation(wav, k_aug, sr=16000, K=31)
    out = jax.block_until_ready(out)

    assert out.shape == (B, T), out.shape
    assert out.dtype == jnp.float32, out.dtype
    assert bool(jnp.all(jnp.isfinite(out)))
    print("KERNEL_OK")
</pallas_src>

<mosaic_0001>
module attributes {stable_mosaic.version = 11 : i64} {
  func.func @kernel(%arg0: i32, %arg1: memref<1x8x128xf32, #tpu.memory_space<vmem>>, %arg2: memref<1x8x128xf32, #tpu.memory_space<vmem>>, %arg3: memref<1x3x128x128xbf16, #tpu.memory_space<vmem>>, %arg4: memref<1x1x128xf32, #tpu.memory_space<vmem>>, %arg5: memref<1x8x128xf32, #tpu.memory_space<vmem>>) attributes {dimension_semantics = [#tpu.dimension_semantics<parallel>], iteration_bounds = array<i64: 4>, scalar_prefetch = 0 : i64, scratch_operands = 0 : i64, tpu.core_type = #tpu.core_type<tc>, window_params = [{transform_indices = @transform_0, window_bounds = array<i64: 1, 8, 128>}, {transform_indices = @transform_1, window_bounds = array<i64: 1, 8, 128>}, {transform_indices = @transform_2, window_bounds = array<i64: 1, 3, 128, 128>}, {transform_indices = @transform_3, window_bounds = array<i64: 1, 1, 128>}, {transform_indices = @transform_4, window_bounds = array<i64: 1, 8, 128>}]} {
    %c0 = arith.constant 0 : index
    %c0_0 = arith.constant 0 : index
    %c0_1 = arith.constant 0 : index
    %0 = vector.load %arg1[%c0, %c0_0, %c0_1] : memref<1x8x128xf32, #tpu.memory_space<vmem>>, vector<1x8x128xf32>
    %1 = vector.shape_cast %0 : vector<1x8x128xf32> to vector<8x128xf32>
    %c0_2 = arith.constant 0 : index
    %c0_3 = arith.constant 0 : index
    %c0_4 = arith.constant 0 : index
    %2 = vector.load %arg2[%c0_2, %c0_3, %c0_4] : memref<1x8x128xf32, #tpu.memory_space<vmem>>, vector<1x8x128xf32>
    %3 = vector.shape_cast %2 : vector<1x8x128xf32> to vector<8x128xf32>
    %c0_5 = arith.constant 0 : index
    %c0_6 = arith.constant 0 : index
    %c0_7 = arith.constant 0 : index
    %4 = vector.load %arg4[%c0_5, %c0_6, %c0_7] : memref<1x1x128xf32, #tpu.memory_space<vmem>>, vector<1x1x128xf32>
    %5 = vector.shape_cast %4 : vector<1x1x128xf32> to vector<1x128xf32>
    %6 = vector.extract_strided_slice %5 {offsets = [0, 0], sizes = [1, 1], strides = [1, 1]} : vector<1x128xf32> to vector<1x1xf32>
    %7 = arith.mulf %1, %1 : vector<8x128xf32>
    %cst = arith.constant dense<0.000000e+00> : vector<8xf32>
    %8 = vector.multi_reduction <add>, %7, %cst [1] : vector<8x128xf32> to vector<8xf32>
    %9 = vector.shape_cast %8 : vector<8xf32> to vector<8x1xf32>
    %cst_8 = arith.constant dense<0.000000e+00> : vector<1xf32>
    %10 = vector.multi_reduction <add>, %9, %cst_8 [0] : vector<8x1xf32> to vector<1xf32>
    %11 = vector.shape_cast %10 : vector<1xf32> to vector<1x1xf32>
    %cst_9 = arith.constant 9.765625E-4 : f32
    %12 = vector.broadcast %cst_9 : f32 to vector<1x1xf32>
    %13 = arith.mulf %11, %12 : vector<1x1xf32>
    %14 = arith.mulf %3, %3 : vector<8x128xf32>
    %cst_10 = arith.constant dense<0.000000e+00> : vector<8xf32>
    %15 = vector.multi_reduction <add>, %14, %cst_10 [1] : vector<8x128xf32> to vector<8xf32>
    %16 = vector.shape_cast %15 : vector<8xf32> to vector<8x1xf32>
    %cst_11 = arith.constant dense<0.000000e+00> : vector<1xf32>
    %17 = vector.multi_reduction <add>, %16, %cst_11 [0] : vector<8x1xf32> to vector<1xf32>
    %18 = vector.shape_cast %17 : vector<1xf32> to vector<1x1xf32>
    %cst_12 = arith.constant 9.765625E-4 : f32
    %19 = vector.broadcast %cst_12 : f32 to vector<1x1xf32>
    %20 = arith.mulf %18, %19 : vector<1x1xf32>
    %cst_13 = arith.constant 9.99999996E-13 : f32
    %21 = vector.broadcast %cst_13 : f32 to vector<1x1xf32>
    %22 = arith.addf %20, %21 : vector<1x1xf32>
    %23 = arith.divf %13, %22 : vector<1x1xf32>
    %24 = math.sqrt %23 : vector<1x1xf32>
    %25 = arith.mulf %6, %24 : vector<1x1xf32>
    %26 = vector.broadcast %25 : vector<1x1xf32> to vector<8x128xf32>
    %27 = arith.mulf %26, %3 : vector<8x128xf32>
    %28 = arith.addf %1, %27 : vector<8x128xf32>
    %cst_14 = arith.constant 0.000000e+00 : f32
    %29 = vector.broadcast %cst_14 : f32 to vector<1x128xf32>
    %30 = vector.extract_strided_slice %28 {offsets = [0, 0], sizes = [7, 128], strides = [1, 1]} : vector<8x128xf32> to vector<7x128xf32>
    %31 = tpu.concatenate %29, %30 in 0 : vector<1x128xf32>, vector<7x128xf32> -> vector<8x128xf32>
    %32 = vector.extract_strided_slice %28 {offsets = [1, 0], sizes = [7, 128], strides = [1, 1]} : vector<8x128xf32> to vector<7x128xf32>
    %33 = tpu.concatenate %32, %29 in 0 : vector<7x128xf32>, vector<1x128xf32> -> vector<8x128xf32>
    %34 = arith.truncf %31 : vector<8x128xf32> to vector<8x128xbf16>
    %35 = arith.truncf %28 : vector<8x128xf32> to vector<8x128xbf16>
    %36 = arith.truncf %33 : vector<8x128xf32> to vector<8x128xbf16>
    %c0_15 = arith.constant 0 : index
    %c0_16 = arith.constant 0 : index
    %c0_17 = arith.constant 0 : index
    %c0_18 = arith.constant 0 : index
    %37 = vector.load %arg3[%c0_15, %c0_16, %c0_17, %c0_18] : memref<1x3x128x128xbf16, #tpu.memory_space<vmem>>, vector<1x1x128x128xbf16>
    %38 = vector.shape_cast %37 : vector<1x1x128x128xbf16> to vector<128x128xbf16>
    %cst_19 = arith.constant dense<0.000000e+00> : vector<8x128xf32>
    %39 = tpu.matmul %34, %38, %cst_19 {dimension_numbers = #tpu.dot_dimension_numbers<[1], [0], [0], [1], [0, 0, 1, 1], [], []>} : vector<8x128xbf16>, vector<128x128xbf16>, vector<8x128xf32> -> vector<8x128xf32>
    %c0_20 = arith.constant 0 : index
    %c1 = arith.constant 1 : index
    %c0_21 = arith.constant 0 : index
    %c0_22 = arith.constant 0 : index
    %40 = vector.load %arg3[%c0_20, %c1, %c0_21, %c0_22] : memref<1x3x128x128xbf16, #tpu.memory_space<vmem>>, vector<1x1x128x128xbf16>
    %41 = vector.shape_cast %40 : vector<1x1x128x128xbf16> to vector<128x128xbf16>
    %cst_23 = arith.constant dense<0.000000e+00> : vector<8x128xf32>
    %42 = tpu.matmul %35, %41, %cst_23 {dimension_numbers = #tpu.dot_dimension_numbers<[1], [0], [0], [1], [0, 0, 1, 1], [], []>} : vector<8x128xbf16>, vector<128x128xbf16>, vector<8x128xf32> -> vector<8x128xf32>
    %43 = arith.addf %39, %42 : vector<8x128xf32>
    %c0_24 = arith.constant 0 : index
    %c2 = arith.constant 2 : index
    %c0_25 = arith.constant 0 : index
    %c0_26 = arith.constant 0 : index
    %44 = vector.load %arg3[%c0_24, %c2, %c0_25, %c0_26] : memref<1x3x128x128xbf16, #tpu.memory_space<vmem>>, vector<1x1x128x128xbf16>
    %45 = vector.shape_cast %44 : vector<1x1x128x128xbf16> to vector<128x128xbf16>
    %cst_27 = arith.constant dense<0.000000e+00> : vector<8x128xf32>
    %46 = tpu.matmul %36, %45, %cst_27 {dimension_numbers = #tpu.dot_dimension_numbers<[1], [0], [0], [1], [0, 0, 1, 1], [], []>} : vector<8x128xbf16>, vector<128x128xbf16>, vector<8x128xf32> -> vector<8x128xf32>
    %47 = arith.addf %43, %46 : vector<8x128xf32>
    %c0_28 = arith.constant 0 : index
    %c0_29 = arith.constant 0 : index
    %c0_30 = arith.constant 0 : index
    %48 = vector.load %arg5[%c0_28, %c0_29, %c0_30] : memref<1x8x128xf32, #tpu.memory_space<vmem>>, vector<1x8x128xf32>
    %49 = vector.shape_cast %48 : vector<1x8x128xf32> to vector<8x128xf32>
    %50 = vector.shape_cast %47 : vector<8x128xf32> to vector<1x8x128xf32>
    tpu.vector_store %arg5[%c0_28, %c0_29, %c0_30], %50 {strides = array<i32>} : memref<1x8x128xf32, #tpu.memory_space<vmem>>, vector<1x8x128xf32>,
    return
  }
  func.func @transform_0(%arg0: i32) -> (i32, i32, i32) {
    %c0_i32 = arith.constant 0 : i32
    %c0_i32_0 = arith.constant 0 : i32
    %c0_i32_1 = arith.constant 0 : i32
    return %arg0, %c0_i32, %c0_i32_0 : i32, i32, i32
  }
  func.func @transform_1(%arg0: i32) -> (i32, i32, i32) {
    %c0_i32 = arith.constant 0 : i32
    %c0_i32_0 = arith.constant 0 : i32
    %c0_i32_1 = arith.constant 0 : i32
    return %arg0, %c0_i32, %c0_i32_0 : i32, i32, i32
  }
  func.func @transform_2(%arg0: i32) -> (i32, i32, i32, i32) {
    %c0_i32 = arith.constant 0 : i32
    %c0_i32_0 = arith.constant 0 : i32
    %c0_i32_1 = arith.constant 0 : i32
    %c0_i32_2 = arith.constant 0 : i32
    return %arg0, %c0_i32, %c0_i32_0, %c0_i32_1 : i32, i32, i32, i32
  }
  func.func @transform_3(%arg0: i32) -> (i32, i32, i32) {
    %c0_i32 = arith.constant 0 : i32
    %c0_i32_0 = arith.constant 0 : i32
    %c0_i32_1 = arith.constant 0 : i32
    return %arg0, %c0_i32, %c0_i32_0 : i32, i32, i32
  }
  func.func @transform_4(%arg0: i32) -> (i32, i32, i32) {
    %c0_i32 = arith.constant 0 : i32
    %c0_i32_0 = arith.constant 0 : i32
    %c0_i32_1 = arith.constant 0 : i32
    return %arg0, %c0_i32, %c0_i32_0 : i32, i32, i32
  }
}

</mosaic_0001>

<llo_original>
// kernel: tpu_custom_call.1
$region0: #{tpu_custom_call.1}
  #allocation0 [shape = 'u32[]', space=smem, size = 0x4, offset = 0x4, fixed_abs, tag = 'smem constant byte address 0x4 - core index']
  #allocation1 [shape = 'u32[72,128]{1,0:T(1,128)}', space=vmem, size = 0x9000, scoped, tag = 'internal scratch']
  %s0 = inlined_call_operand.hbm [shape: f32[4,8,128], index: 0, kind: input, shape index: {}]
  %s1 = inlined_call_operand.hbm [shape: f32[4,8,128], index: 1, kind: input, shape index: {}]
  %s2 = inlined_call_operand.hbm [shape: bf16[4,3,128,128], index: 2, kind: input, shape index: {}]
  %s3 = inlined_call_operand.hbm [shape: f32[4,1,128], index: 3, kind: input, shape index: {}]
  %s4 = inlined_call_operand.hbm [shape: f32[4,8,128], index: 4, kind: output, shape index: {}]
  %s5 = sld [smem:[#allocation0]]
  $region65: #{tpu_custom_call.1} parent=0
    _
  %s7 = ssub.s32 1, %s5
  %s8 = scalar_select 0, %s7, %s5
  $region1: #{tpu_custom_call.1} parent=0
    #allocation2 [shape = 'u8[8192]{0}', space=vmem, size = 0x2000, scoped, tag = 'input window, operand 0']
    #allocation3 [shape = 's32[2]{0}', space=sflag, size = 0x8, scoped, tag = 'scoped memory for tpu_custom_call.1']
    #allocation4 [shape = 's32[2]{0}', space=sflag, size = 0x8, scoped, tag = 'scoped memory for tpu_custom_call.1']
    #allocation5 [shape = 'u8[8192]{0}', space=vmem, size = 0x2000, scoped, tag = 'input window, operand 1']
    #allocation6 [shape = 's32[2]{0}', space=sflag, size = 0x8, scoped, tag = 'scoped memory for tpu_custom_call.1']
    #allocation7 [shape = 'u8[196608]{0}', space=vmem, size = 0x30000, scoped, tag = 'input window, operand 2']
    #allocation8 [shape = 'u8[1024]{0}', space=vmem, size = 0x400, scoped, tag = 'input window, operand 3']
    #allocation9 [shape = 's32[2]{0}', space=sflag, size = 0x8, scoped, tag = 'scoped memory for tpu_custom_call.1']
    #allocation10 [shape = 'u8[8192]{0}', space=vmem, size = 0x2000, scoped, tag = 'output window, operand 0']
    %9 = vsyncpa [#allocation3], 0
    %s10 = scalar_lea.sflag [#allocation3], 1
    %11 = vsyncpa %s10, 0
    %12 = vsyncpa [#allocation6], 0
    %s13 = scalar_lea.sflag [#allocation6], 1
    %14 = vsyncpa %s13, 0
    %15 = vsyncpa [#allocation9], 0
    %s16 = scalar_lea.sflag [#allocation9], 1
    %17 = vsyncpa %s16, 0
    %18 = vsyncpa [#allocation4], 0
    %s19 = scalar_lea.sflag [#allocation4], 1
    %20 = vsyncpa %s19, 0
    loop: start=0, step=1, limit=6
    $region2: #{tpu_custom_call.1} parent=1 // loop_pre_header
      _
    $region3: #{tpu_custom_call.1} parent=1 // loop_header
      %s22 = sphi 0, %s26
      %p23 = scmp.ge.s32.totalorder %s22, 6
      %s32 = sphi 0, %s34
      %s35 = sphi 0, %s32
      %s36 = sphi 0, %s35
      %s52 = sphi 0, %s36
      %s58 = sphi 0, %s60
      %s61 = sphi 0, %s58
      %s62 = sphi 0, %s61
      %s78 = sphi 0, %s62
      %s84 = sphi 0, %s86
      %s87 = sphi 0, %s84
      %s88 = sphi 0, %s87
      %s104 = sphi 0, %s88
      %s110 = sphi 0, %s112
      %s113 = sphi 0, %s110
      %s114 = sphi 0, %s113
      %s130 = sphi 0, %s114
      %s136 = sphi 0, %s138
      %s139 = sphi 0, %s136
      %s140 = sphi 0, %s139
      %s156 = sphi 0, %s140
    $region4: #{tpu_custom_call.1} parent=1 // loop_header_branch
      %25 = sbr.rel (%p23) target = $region8
    $region5: #{tpu_custom_call.1} parent=1 // loop_body
      %s27 = ssub.s32 %s22, 1
      %s28 = ssub.s32 %s22, 2
      %s29 = sadd.s32 %s22, 1
      %s30 = ssub.s32 %s22, %s29
      %p31 = scmp.eq.s32.totalorder %s30, 0
      %s33 = sadd.s32 %s32, 1
      %s34 = scalar_select %p31, %s32, %s33
      %p37 = pneg %p31
      %p38 = scmp.eq.s32.totalorder %s22, 3
      %p39 = por %p37, %p38
      %p40 = scmp.ne.s32.totalorder %s32, %s35
      %p41 = scmp.eq.s32.totalorder %s22, 0
      %p42 = por %p40, %p41
      %p43 = scmp.ne.s32.totalorder %s32, %s35
      %p44 = scmp.eq.s32.totalorder %s27, 3
      %p45 = por %p43, %p44
      %p46 = scmp.ne.s32.totalorder %s35, %s36
      %p47 = scmp.eq.s32.totalorder %s27, 0
      %p48 = por %p46, %p47
      %p49 = scmp.ne.s32.totalorder %s35, %s36
      %p50 = scmp.eq.s32.totalorder %s28, 3
      %p51 = por %p49, %p50
      %p53 = scmp.ne.s32.totalorder %s36, %s52
      %p54 = scmp.eq.s32.totalorder %s28, 0
      %p55 = por %p53, %p54
      %s56 = ssub.s32 %s22, %s29
      %p57 = scmp.eq.s32.totalorder %s56, 0
      %s59 = sadd.s32 %s58, 1
      %s60 = scalar_select %p57, %s58, %s59
      %p63 = pneg %p57
      %p64 = scmp.eq.s32.totalorder %s22, 3
      %p65 = por %p63, %p64
      %p66 = scmp.ne.s32.totalorder %s58, %s61
      %p67 = scmp.eq.s32.totalorder %s22, 0
      %p68 = por %p66, %p67
      %p69 = scmp.ne.s32.totalorder %s58, %s61
      %p70 = scmp.eq.s32.totalorder %s27, 3
      %p71 = por %p69, %p70
      %p72 = scmp.ne.s32.totalorder %s61, %s62
      %p73 = scmp.eq.s32.totalorder %s27, 0
      %p74 = por %p72, %p73
      %p75 = scmp.ne.s32.totalorder %s61, %s62
      %p76 = scmp.eq.s32.totalorder %s28, 3
      %p77 = por %p75, %p76
      %p79 = scmp.ne.s32.totalorder %s62, %s78
      %p80 = scmp.eq.s32.totalorder %s28, 0
      %p81 = por %p79, %p80
      %s82 = ssub.s32 %s22, %s29
      %p83 = scmp.eq.s32.totalorder %s82, 0
      %s85 = sadd.s32 %s84, 1
      %s86 = scalar_select %p83, %s84, %s85
      %p89 = pneg %p83
      %p90 = scmp.eq.s32.totalorder %s22, 3
      %p91 = por %p89, %p90
      %p92 = scmp.ne.s32.totalorder %s84, %s87
      %p93 = scmp.eq.s32.totalorder %s22, 0
      %p94 = por %p92, %p93
      %p95 = scmp.ne.s32.totalorder %s84, %s87
      %p96 = scmp.eq.s32.totalorder %s27, 3
      %p97 = por %p95, %p96
      %p98 = scmp.ne.s32.totalorder %s87, %s88
      %p99 = scmp.eq.s32.totalorder %s27, 0
      %p100 = por %p98, %p99
      %p101 = scmp.ne.s32.totalorder %s87, %s88
      %p102 = scmp.eq.s32.totalorder %s28, 3
      %p103 = por %p101, %p102
      %p105 = scmp.ne.s32.totalorder %s88, %s104
      %p106 = scmp.eq.s32.totalorder %s28, 0
      %p107 = por %p105, %p106
      %s108 = ssub.s32 %s22, %s29
      %p109 = scmp.eq.s32.totalorder %s108, 0
      %s111 = sadd.s32 %s110, 1
      %s112 = scalar_select %p109, %s110, %s111
      %p115 = pneg %p109
      %p116 = scmp.eq.s32.totalorder %s22, 3
      %p117 = por %p115, %p116
      %p118 = scmp.ne.s32.totalorder %s110, %s113
      %p119 = scmp.eq.s32.totalorder %s22, 0
      %p120 = por %p118, %p119
      %p121 = scmp.ne.s32.totalorder %s110, %s113
      %p122 = scmp.eq.s32.totalorder %s27, 3
      %p123 = por %p121, %p122
      %p124 = scmp.ne.s32.totalorder %s113, %s114
      %p125 = scmp.eq.s32.totalorder %s27, 0
      %p126 = por %p124, %p125
      %p127 = scmp.ne.s32.totalorder %s113, %s114
      %p128 = scmp.eq.s32.totalorder %s28, 3
      %p129 = por %p127, %p128
      %p131 = scmp.ne.s32.totalorder %s114, %s130
      %p132 = scmp.eq.s32.totalorder %s28, 0
      %p133 = por %p131, %p132
      %s134 = ssub.s32 %s22, %s29
      %p135 = scmp.eq.s32.totalorder %s134, 0
      %s137 = sadd.s32 %s136, 1
      %s138 = scalar_select %p135, %s136, %s137
      %p141 = pneg %p135
      %p142 = scmp.eq.s32.totalorder %s22, 3
      %p143 = por %p141, %p142
      %p144 = scmp.ne.s32.totalorder %s136, %s139
      %p145 = scmp.eq.s32.totalorder %s22, 0
      %p146 = por %p144, %p145
      %p147 = scmp.ne.s32.totalorder %s136, %s139
      %p148 = scmp.eq.s32.totalorder %s27, 3
      %p149 = por %p147, %p148
      %p150 = scmp.ne.s32.totalorder %s139, %s140
      %p151 = scmp.eq.s32.totalorder %s27, 0
      %p152 = por %p150, %p151
      %p153 = scmp.ne.s32.totalorder %s139, %s140
      %p154 = scmp.eq.s32.totalorder %s28, 3
      %p155 = por %p153, %p154
      %p157 = scmp.ne.s32.totalorder %s140, %s156
      %p158 = scmp.eq.s32.totalorder %s28, 0
      %p159 = por %p157, %p158
      %p160 = scmp.le.s32.totalorder 1, %s22
      %p161 = scmp.lt.s32.totalorder %s22, 5
      %p162 = pnand %p160, %p161
      %p163 = pneg %p162
      // Predicated region
      $region9: #{tpu_custom_call.1} parent=5 // pred_check
        _
      $region10: #{tpu_custom_call.1} parent=5 // pred_check_branch
        %165 = sbr.rel (%p162) target = $region12
      $region11: #{tpu_custom_call.1} parent=5 // pred_region
        %s166 = ssub.s32 %s22, 1
      $region12: #{tpu_custom_call.1} parent=5 // pred_fallthru
        _
      %p167 = scmp.lt.s32.totalorder %s22, 4
      // Predicated region
      $region13: #{tpu_custom_call.1} parent=5 // pred_check
        %p168 = pneg %p167
      $region14: #{tpu_custom_call.1} parent=5 // pred_check_branch
        %170 = sbr.rel (%p168) target = $region16
      $region15: #{tpu_custom_call.1} parent=5 // pred_region
        // Predicated region
        $region17: #{tpu_custom_call.1} parent=15 // pred_check
          %p171 = pneg %p42
        $region18: #{tpu_custom_call.1} parent=15 // pred_check_branch
          %173 = sbr.rel (%p171) target = $region20
        $region19: #{tpu_custom_call.1} parent=15 // pred_region
          %s174 = sand.u32 %s32, 1
          %s175 = scalar_lea.sflag [#allocation3], %s174
          %s176 = sand.u32 %s32, 1
          %s177 = smul.addr %s176, 8
          %s178 = scalar_lea.vmem [#allocation2], %s177
          %180 = vsyncadd %s175, 0
          %s181 = smul.addr %s22, 8
          %s182 = scalar_lea.hbm %s0, %s181
          %s184 = sshll.u32 %s182, 4
          %s185 = int_to_ptr.hbm [resolvable:$true] %s184
          %s186 = sshll.u32 %s178, 4
          %s187 = int_to_ptr.vmem [resolvable:$true] %s186
          %189 = dma.hbm_to_vmem [thread:$0]  %s185, 128, %s187, %s175
        $region20: #{tpu_custom_call.1} parent=15 // pred_fallthru
          _
        // Predicated region
        $region21: #{tpu_custom_call.1} parent=15 // pred_check
          %p190 = pneg %p68
        $region22: #{tpu_custom_call.1} parent=15 // pred_check_branch
          %192 = sbr.rel (%p190) target = $region24
        $region23: #{tpu_custom_call.1} parent=15 // pred_region
          %s193 = sand.u32 %s22, 1
          %s194 = scalar_lea.sflag [#allocation6], %s193
          %s195 = sand.u32 %s58, 1
          %s196 = smul.addr %s195, 8
          %s197 = scalar_lea.vmem [#allocation5], %s196
          %199 = vsyncadd %s194, 0
          %s200 = smul.addr %s22, 8
          %s201 = scalar_lea.hbm %s1, %s200
          %s203 = sshll.u32 %s201, 4
          %s204 = int_to_ptr.hbm [resolvable:$true] %s203
          %s205 = sshll.u32 %s197, 4
          %s206 = int_to_ptr.vmem [resolvable:$true] %s205
          %208 = dma.hbm_to_vmem [thread:$0]  %s204, 128, %s206, %s194
        $region24: #{tpu_custom_call.1} parent=15 // pred_fallthru
          _
        // Predicated region
        $region25: #{tpu_custom_call.1} parent=15 // pred_check
          %p209 = pneg %p94
        $region26: #{tpu_custom_call.1} parent=15 // pred_check_branch
          %211 = sbr.rel (%p209) target = $region28
        $region27: #{tpu_custom_call.1} parent=15 // pred_region
          %s212 = sand.u32 %s22, 1
          %s213 = scalar_lea.sflag [#allocation6], %s212
          %s214 = sand.u32 %s84, 1
          %s215 = smul.addr %s214, 192
          %s216 = scalar_lea.vmem [#allocation7], %s215
          %218 = vsyncadd %s213, 0
          %s219 = smul.addr %s22, 48
          %s220 = smul.addr %s219, 4
          %s221 = scalar_lea.hbm %s2, %s220
          %s222 = sshll.u32 %s221, 4
          %s223 = int_to_ptr.hbm [resolvable:$true] %s222
          %s224 = sshll.u32 %s216, 4
          %s225 = int_to_ptr.vmem [resolvable:$true] %s224
          %230 = dma.hbm_to_vmem [thread:$0]  %s223, 3072, %s225, %s213, 64, 64, 4
        $region28: #{tpu_custom_call.1} parent=15 // pred_fallthru
          _
        // Predicated region
        $region29: #{tpu_custom_call.1} parent=15 // pred_check
          %p231 = pneg %p120
        $region30: #{tpu_custom_call.1} parent=15 // pred_check_branch
          %233 = sbr.rel (%p231) target = $region32
        $region31: #{tpu_custom_call.1} parent=15 // pred_region
          %s234 = sand.u32 %s110, 1
          %s235 = scalar_lea.sflag [#allocation9], %s234
          %s236 = sand.u32 %s110, 1
          %s237 = scalar_lea.vmem [#allocation8], %s236
          %239 = vsyncadd %s235, 0
          %s240 = scalar_lea.hbm %s3, %s22
          %s242 = sshll.u32 %s240, 4
          %s243 = int_to_ptr.hbm [resolvable:$true] %s242
          %s244 = sshll.u32 %s237, 4
          %s245 = int_to_ptr.vmem [resolvable:$true] %s244
          %247 = dma.hbm_to_vmem [thread:$0]  %s243, 16, %s245, %s235
        $region32: #{tpu_custom_call.1} parent=15 // pred_fallthru
          _
      $region16: #{tpu_custom_call.1} parent=5 // pred_fallthru
        _
      %p248 = scmp.le.s32.totalorder 1, %s22
      %p249 = scmp.lt.s32.totalorder %s22, 5
      %p250 = pnand %p248, %p249
      %p251 = pneg %p250
      // Predicated region
      $region33: #{tpu_custom_call.1} parent=5 // pred_check
        _
      $region34: #{tpu_custom_call.1} parent=5 // pred_check_branch
        %253 = sbr.rel (%p250) target = $region36
      $region35: #{tpu_custom_call.1} parent=5 // pred_region
        %s254 = ssub.s32 %s22, 1
        %s255 = sand.u32 %s35, 1
        %s256 = scalar_lea.sflag [#allocation3], %s255
        %s257 = sand.u32 %s35, 1
        %s258 = smul.addr %s257, 8
        %s259 = scalar_lea.vmem [#allocation2], %s258
        // Predicated region
        $region37: #{tpu_custom_call.1} parent=35 // pred_check
          %p260 = pneg %p48
        $region38: #{tpu_custom_call.1} parent=35 // pred_check_branch
          %262 = sbr.rel (%p260) target = $region40
        $region39: #{tpu_custom_call.1} parent=35 // pred_region
          %264 = dma.done %s256, 128
        $region40: #{tpu_custom_call.1} parent=35 // pred_fallthru
          _
        %s265 = sand.u32 %s27, 1
        %s266 = scalar_lea.sflag [#allocation6], %s265
        %s267 = sand.u32 %s61, 1
        %s268 = smul.addr %s267, 8
        %s269 = scalar_lea.vmem [#allocation5], %s268
        // Predicated region
        $region41: #{tpu_custom_call.1} parent=35 // pred_check
          %p270 = pneg %p74
        $region42: #{tpu_custom_call.1} parent=35 // pred_check_branch
          %272 = sbr.rel (%p270) target = $region44
        $region43: #{tpu_custom_call.1} parent=35 // pred_region
          %274 = dma.done %s266, 128
        $region44: #{tpu_custom_call.1} parent=35 // pred_fallthru
          _
        %s275 = sand.u32 %s27, 1
        %s276 = scalar_lea.sflag [#allocation6], %s275
        %s277 = sand.u32 %s87, 1
        %s278 = smul.addr %s277, 192
        %s279 = scalar_lea.vmem [#allocation7], %s278
        // Predicated region
        $region45: #{tpu_custom_call.1} parent=35 // pred_check
          %p280 = pneg %p100
        $region46: #{tpu_custom_call.1} parent=35 // pred_check_branch
          %282 = sbr.rel (%p280) target = $region48
        $region47: #{tpu_custom_call.1} parent=35 // pred_region
          %284 = dma.done %s276, 3072
        $region48: #{tpu_custom_call.1} parent=35 // pred_fallthru
          _
        %s285 = sand.u32 %s113, 1
        %s286 = scalar_lea.sflag [#allocation9], %s285
        %s287 = sand.u32 %s113, 1
        %s288 = scalar_lea.vmem [#allocation8], %s287
        // Predicated region
        $region49: #{tpu_custom_call.1} parent=35 // pred_check
          %p289 = pneg %p126
        $region50: #{tpu_custom_call.1} parent=35 // pred_check_branch
          %291 = sbr.rel (%p289) target = $region52
        $region51: #{tpu_custom_call.1} parent=35 // pred_region
          %293 = dma.done %s286, 16
        $region52: #{tpu_custom_call.1} parent=35 // pred_fallthru
          _
        %s294 = sand.u32 %s35, 1
        %s295 = scalar_lea.sflag [#allocation3], %s294
        %s296 = sand.u32 %s35, 1
        %s297 = smul.addr %s296, 8
        %s298 = scalar_lea.vmem [#allocation2], %s297
        %p299 = pneg %p48
        %p300 = pneg %p45
        %s301 = sand.u32 %s27, 1
        %s302 = scalar_lea.sflag [#allocation6], %s301
        %s303 = sand.u32 %s61, 1
        %s304 = smul.addr %s303, 8
        %s305 = scalar_lea.vmem [#allocation5], %s304
        %p306 = pneg %p74
        %p307 = pneg %p71
        %s308 = sand.u32 %s27, 1
        %s309 = scalar_lea.sflag [#allocation6], %s308
        %s310 = sand.u32 %s87, 1
        %s311 = smul.addr %s310, 192
        %s312 = scalar_lea.vmem [#allocation7], %s311
        %p313 = pneg %p100
        %p314 = pneg %p97
        %s315 = sand.u32 %s113, 1
        %s316 = scalar_lea.sflag [#allocation9], %s315
        %s317 = sand.u32 %s113, 1
        %s318 = scalar_lea.vmem [#allocation8], %s317
        %p319 = pneg %p126
        %p320 = pneg %p123
        %p321 = pneg %p152
        %p322 = pneg %p149
        %s323 = sand.u32 %s139, 1
        %s324 = scalar_lea.sflag [#allocation4], %s323
        %s325 = sand.u32 %s139, 1
        %s326 = smul.addr %s325, 8
        %s327 = scalar_lea.vmem [#allocation10], %s326
        %v328 = vld [vmem:[%s259] sm:$0xff]
        %v329 = vld [vmem:[%s269] sm:$0xff]
        %v330 = vld [vmem:[%s288] sm:$0x1]
        %v331 = vmul.f32 %v328, %v328
        %332 = vadd.xlane.f32.xlu0 %v331
        %v333 = vpop.xlane.xlu0 %332
        %v334 = vrot.slane %v333, 4
        %v335 = vadd.f32 %v333, %v334
        %v336 = vrot.slane %v335, 2
        %v337 = vadd.f32 %v335, %v336
        %v338 = vrot.slane %v337, 1
        %v339 = vadd.f32 %v337, %v338
        %v340 = vmul.f32 %v339, 0.0009765625
        %v341 = vmul.f32 %v329, %v329
        %342 = vadd.xlane.f32.xlu0 %v341
        %v343 = vpop.xlane.xlu0 %342
        %v344 = vrot.slane %v343, 4
        %v345 = vadd.f32 %v343, %v344
        %v346 = vrot.slane %v345, 2
        %v347 = vadd.f32 %v345, %v346
        %v348 = vrot.slane %v347, 1
        %v349 = vadd.f32 %v347, %v348
        %v350 = vmul.f32 %v349, 0.0009765625
        %v351 = vadd.f32 %v350, 1e-12
        %v352 = vrcp.pop %v351
        %v353 = vmul.f32 %v351, %v352
        %v354 = vsub.f32 1.0, %v353
        %v355 = vmul.f32 %v352, %v354
        %v356 = vadd.f32 %v352, %v355
        %vm357 = vweird.f32 %v351
        %vm358 = vweird.f32 %v352
        %vm359 = vmor %vm357, %vm358
        %v360 = vsel %vm359, %v352, %v356
        %v361 = vand.u32 2147483647, %v351
        %vm362 = vcmp.eq.f32.partialorder %v361, 8.507059e+37
        %v363 = vand.u32 %v351, 2147483648
        %v364 = vor.u32 1.1754944e-38, %v363
        %v365 = vsel %vm362, %v364, %v360
        %v366 = vmul.f32 %v340, %v365
        %v367 = vrsqrt.pop %v366
        %v368 = vmul.f32 %v367, %v366
        %v369 = vmul.f32 %v368, %v367
        %v370 = vmul.f32 0.5, %v369
        %v371 = vsub.f32 1.5, %v370
        %v372 = vmul.f32 %v367, %v371
        %v373 = vmul.f32 %v366, %v372
        %vm374 = vcmp.eq.f32.partialorder %v366, inf
        %v375 = vsel %vm374, %v366, %v373
        %vm376 = vcmp.eq.f32.partialorder %v366, 0.0
        %v377 = vand.u32 %v366, 2147483648
        %v378 = vsel %vm376, %v377, %v375
        %v379 = vmul.f32 %v330, %v378
        %v381 = vperm.slane %v379, 0
        %382 = vset.pattern.permute.xlu0 0
        %383 = vperm.xlu0 %382, %v381
        %v384 = vpop.permute.xlu0 %383
        %v386 = vmul.f32 %v384, %v329
        %v387 = vadd.f32 %v328, %v386
        %v389 = vrot.slane %v387, 7
        %vm391 = vcmask 1040384
        %v392 = vsel %vm391, 0.0, %v389
        %v393 = vrot.slane %v387, 1
        %vm395 = vcmask 1046528
        %v396 = vsel %vm395, %v393, 0.0
        %v397 = vpack.c.bf16 %v392, %v392
        %v398 = vpack.c.bf16 %v387, %v387
        %v399 = vpack.c.bf16 %v396, %v396
        %v400 = vld [vmem:[%s279] sm:$0xf]
        %v401 = vld [vmem:[%s279 + $0x4] sm:$0xf]
        %v402 = vld [vmem:[%s279 + $0x8] sm:$0xf]
        %v403 = vld [vmem:[%s279 + $0xc] sm:$0xf]
        %v404 = vld [vmem:[%s279 + $0x10] sm:$0xf]
        %v405 = vld [vmem:[%s279 + $0x14] sm:$0xf]
        %v406 = vld [vmem:[%s279 + $0x18] sm:$0xf]
        %v407 = vld [vmem:[%s279 + $0x1c] sm:$0xf]
        %v408 = vld [vmem:[%s279 + $0x20] sm:$0xf]
        %v409 = vld [vmem:[%s279 + $0x24] sm:$0xf]
        %v410 = vld [vmem:[%s279 + $0x28] sm:$0xf]
        %v411 = vld [vmem:[%s279 + $0x2c] sm:$0xf]
        %v412 = vld [vmem:[%s279 + $0x30] sm:$0xf]
        %v413 = vld [vmem:[%s279 + $0x34] sm:$0xf]
        %v414 = vld [vmem:[%s279 + $0x38] sm:$0xf]
        %v415 = vld [vmem:[%s279 + $0x3c] sm:$0xf]
        %s416 = scalar_lea.vmem %s279, 64 [#allocation7]
        %v417 = vld [vmem:[%s416] sm:$0xf]
        %v418 = vld [vmem:[%s416 + $0x4] sm:$0xf]
        %v419 = vld [vmem:[%s416 + $0x8] sm:$0xf]
        %v420 = vld [vmem:[%s416 + $0xc] sm:$0xf]
        %v421 = vld [vmem:[%s416 + $0x10] sm:$0xf]
        %v422 = vld [vmem:[%s416 + $0x14] sm:$0xf]
        %v423 = vld [vmem:[%s416 + $0x18] sm:$0xf]
        %v424 = vld [vmem:[%s416 + $0x1c] sm:$0xf]
        %v425 = vld [vmem:[%s416 + $0x20] sm:$0xf]
        %v426 = vld [vmem:[%s416 + $0x24] sm:$0xf]
        %v427 = vld [vmem:[%s416 + $0x28] sm:$0xf]
        %v428 = vld [vmem:[%s416 + $0x2c] sm:$0xf]
        %v429 = vld [vmem:[%s416 + $0x30] sm:$0xf]
        %v430 = vld [vmem:[%s416 + $0x34] sm:$0xf]
        %v431 = vld [vmem:[%s416 + $0x38] sm:$0xf]
        %v432 = vld [vmem:[%s416 + $0x3c] sm:$0xf]
        %v449 = vunpack.c.l.b16 %v417
        %v450 = vunpack.c.l.b16 %v418
        %v451 = vunpack.c.l.b16 %v419
        %v452 = vunpack.c.l.b16 %v420
        %v453 = vunpack.c.l.b16 %v421
        %v454 = vunpack.c.l.b16 %v422
        %v455 = vunpack.c.l.b16 %v423
        %v456 = vunpack.c.l.b16 %v424
        %v457 = vunpack.c.l.b16 %v425
        %v458 = vunpack.c.l.b16 %v426
        %v459 = vunpack.c.l.b16 %v427
        %v460 = vunpack.c.l.b16 %v428
        %v461 = vunpack.c.l.b16 %v429
        %v462 = vunpack.c.l.b16 %v430
        %v463 = vunpack.c.l.b16 %v431
        %v464 = vunpack.c.l.b16 %v432
        %v465 = vpack.c.b16 %v450, %v449
        %v466 = vpack.c.b16 %v452, %v451
        %v467 = vpack.c.b16 %v454, %v453
        %v468 = vpack.c.b16 %v456, %v455
        %v469 = vpack.c.b16 %v458, %v457
        %v470 = vpack.c.b16 %v460, %v459
        %v471 = vpack.c.b16 %v462, %v461
        %v472 = vpack.c.b16 %v464, %v463
        %481 = vmatpush.bf16.msra.mxu0 %v472
        %482 = vmatpush.bf16.msra.mxu0 %v471
        %483 = vmatpush.bf16.msra.mxu0 %v470
        %484 = vmatpush.bf16.msra.mxu0 %v469
        %485 = vmatpush.bf16.msra.mxu0 %v468
        %486 = vmatpush.bf16.msra.mxu0 %v467
        %487 = vmatpush.bf16.msra.mxu0 %v466
        %488 = vmatpush.bf16.msra.mxu0 %v465
        %489 = vmatmul.bf16.gmra.mxu0 %v398
        %v490 = vpop.f32.mrf.mxu0
        %v491 = vadd.f32 0.0, %v490
        %v492 = vpop.f32.mrf.mxu0
        %493 = vdwg.mxu0
        %v510 = vunpack.c.l.b16 %v400
        %v511 = vunpack.c.l.b16 %v401
        %v512 = vunpack.c.l.b16 %v402
        %v513 = vunpack.c.l.b16 %v403
        %v514 = vunpack.c.l.b16 %v404
        %v515 = vunpack.c.l.b16 %v405
        %v516 = vunpack.c.l.b16 %v406
        %v517 = vunpack.c.l.b16 %v407
        %v518 = vunpack.c.l.b16 %v408
        %v519 = vunpack.c.l.b16 %v409
        %v520 = vunpack.c.l.b16 %v410
        %v521 = vunpack.c.l.b16 %v411
        %v522 = vunpack.c.l.b16 %v412
        %v523 = vunpack.c.l.b16 %v413
        %v524 = vunpack.c.l.b16 %v414
        %v525 = vunpack.c.l.b16 %v415
        %v526 = vpack.c.b16 %v511, %v510
        %v527 = vpack.c.b16 %v513, %v512
        %v528 = vpack.c.b16 %v515, %v514
        %v529 = vpack.c.b16 %v517, %v516
        %v530 = vpack.c.b16 %v519, %v518
        %v531 = vpack.c.b16 %v521, %v520
        %v532 = vpack.c.b16 %v523, %v522
        %v533 = vpack.c.b16 %v525, %v524
        %542 = vmatpush.bf16.msra.mxu0 %v533
        %543 = vmatpush.bf16.msra.mxu0 %v532
        %544 = vmatpush.bf16.msra.mxu0 %v531
        %545 = vmatpush.bf16.msra.mxu0 %v530
        %546 = vmatpush.bf16.msra.mxu0 %v529
        %547 = vmatpush.bf16.msra.mxu0 %v528
        %548 = vmatpush.bf16.msra.mxu0 %v527
        %549 = vmatpush.bf16.msra.mxu0 %v526
        %550 = vmatmul.bf16.gmra.mxu0 %v397
        %v551 = vpop.f32.mrf.mxu0
        %v552 = vadd.f32 %v491, %v551
        %v553 = vpop.f32.mrf.mxu0
        %554 = vdwg.mxu0
        %s555 = scalar_lea.vmem %s279, 128 [#allocation7]
        %v556 = vld [vmem:[%s555] sm:$0xf]
        %v557 = vld [vmem:[%s555 + $0x4] sm:$0xf]
        %v558 = vld [vmem:[%s555 + $0x8] sm:$0xf]
        %v559 = vld [vmem:[%s555 + $0xc] sm:$0xf]
        %v560 = vld [vmem:[%s555 + $0x10] sm:$0xf]
        %v561 = vld [vmem:[%s555 + $0x14] sm:$0xf]
        %v562 = vld [vmem:[%s555 + $0x18] sm:$0xf]
        %v563 = vld [vmem:[%s555 + $0x1c] sm:$0xf]
        %v564 = vld [vmem:[%s555 + $0x20] sm:$0xf]
        %v565 = vld [vmem:[%s555 + $0x24] sm:$0xf]
        %v566 = vld [vmem:[%s555 + $0x28] sm:$0xf]
        %v567 = vld [vmem:[%s555 + $0x2c] sm:$0xf]
        %v568 = vld [vmem:[%s555 + $0x30] sm:$0xf]
        %v569 = vld [vmem:[%s555 + $0x34] sm:$0xf]
        %v570 = vld [vmem:[%s555 + $0x38] sm:$0xf]
        %v571 = vld [vmem:[%s555 + $0x3c] sm:$0xf]
        %v588 = vunpack.c.l.b16 %v556
        %v589 = vunpack.c.l.b16 %v557
        %v590 = vunpack.c.l.b16 %v558
        %v591 = vunpack.c.l.b16 %v559
        %v592 = vunpack.c.l.b16 %v560
        %v593 = vunpack.c.l.b16 %v561
        %v594 = vunpack.c.l.b16 %v562
        %v595 = vunpack.c.l.b16 %v563
        %v596 = vunpack.c.l.b16 %v564
        %v597 = vunpack.c.l.b16 %v565
        %v598 = vunpack.c.l.b16 %v566
        %v599 = vunpack.c.l.b16 %v567
        %v600 = vunpack.c.l.b16 %v568
        %v601 = vunpack.c.l.b16 %v569
        %v602 = vunpack.c.l.b16 %v570
        %v603 = vunpack.c.l.b16 %v571
        %v604 = vpack.c.b16 %v589, %v588
        %v605 = vpack.c.b16 %v591, %v590
        %v606 = vpack.c.b16 %v593, %v592
        %v607 = vpack.c.b16 %v595, %v594
        %v608 = vpack.c.b16 %v597, %v596
        %v609 = vpack.c.b16 %v599, %v598
        %v610 = vpack.c.b16 %v601, %v600
        %v611 = vpack.c.b16 %v603, %v602
        %620 = vmatpush.bf16.msra.mxu0 %v611
        %621 = vmatpush.bf16.msra.mxu0 %v610
        %622 = vmatpush.bf16.msra.mxu0 %v609
        %623 = vmatpush.bf16.msra.mxu0 %v608
        %624 = vmatpush.bf16.msra.mxu0 %v607
        %625 = vmatpush.bf16.msra.mxu0 %v606
        %626 = vmatpush.bf16.msra.mxu0 %v605
        %627 = vmatpush.bf16.msra.mxu0 %v604
        %628 = vmatmul.bf16.gmra.mxu0 %v399
        %v629 = vpop.f32.mrf.mxu0
        %v630 = vadd.f32 0.0, %v629
        %v631 = vpop.f32.mrf.mxu0
        %632 = vdwg.mxu0
        %v633 = vadd.f32 %v552, %v630
        %634 = vst [vmem:[%s327] sm:$0xff] %v633
        %s635 = sand.u32 %s139, 1
        %s636 = scalar_lea.sflag [#allocation4], %s635
        %s637 = sand.u32 %s139, 1
        %s638 = smul.addr %s637, 8
        %s639 = scalar_lea.vmem [#allocation10], %s638
        // Predicated region
        $region53: #{tpu_custom_call.1} parent=35 // pred_check
          %p640 = pneg %p149
        $region54: #{tpu_custom_call.1} parent=35 // pred_check_branch
          %642 = sbr.rel (%p640) target = $region56
        $region55: #{tpu_custom_call.1} parent=35 // pred_region
          %644 = vsyncadd %s636, 0
          %s645 = smul.addr %s27, 8
          %s646 = scalar_lea.hbm %s4, %s645
          %s648 = sshll.u32 %s639, 4
          %s649 = int_to_ptr.vmem [resolvable:$true] %s648
          %s650 = sshll.u32 %s646, 4
          %s651 = int_to_ptr.hbm [resolvable:$true] %s650
          %653 = dma.vmem_to_hbm [thread:$0]  %s649, 128, %s651, %s636
        $region56: #{tpu_custom_call.1} parent=35 // pred_fallthru
          _
      $region36: #{tpu_custom_call.1} parent=5 // pred_fallthru
        _
      %p654 = scmp.le.s32.totalorder 2, %s22
      // Predicated region
      $region57: #{tpu_custom_call.1} parent=5 // pred_check
        %p655 = pneg %p654
      $region58: #{tpu_custom_call.1} parent=5 // pred_check_branch
        %657 = sbr.rel (%p655) target = $region60
      $region59: #{tpu_custom_call.1} parent=5 // pred_region
        %s658 = ssub.s32 %s22, 2
        // Predicated region
        $region61: #{tpu_custom_call.1} parent=59 // pred_check
          %p659 = pneg %p155
        $region62: #{tpu_custom_call.1} parent=59 // pred_check_branch
          %661 = sbr.rel (%p659) target = $region64
        $region63: #{tpu_custom_call.1} parent=59 // pred_region
          %s662 = sand.u32 %s140, 1
          %s663 = scalar_lea.sflag [#allocation4], %s662
          %s664 = sand.u32 %s140, 1
          %s665 = smul.addr %s664, 8
          %s666 = scalar_lea.vmem [#allocation10], %s665
          %668 = dma.done %s663, 128
        $region64: #{tpu_custom_call.1} parent=59 // pred_fallthru
          _
      $region60: #{tpu_custom_call.1} parent=5 // pred_fallthru
        _
    $region6: #{tpu_custom_call.1} parent=1 // loop_footer
      %s26 = sadd.s32 1, %s22
    $region7: #{tpu_custom_call.1} parent=1 // loop_footer_branch
      %21 = sbr.rel target = $region3
    $region8: #{tpu_custom_call.1} parent=1 // loop_exit
      _
    %669 = vsyncpa [#allocation3], 1
    %s670 = scalar_lea.sflag [#allocation3], 1
    %671 = vsyncpa %s670, 1
    %672 = vsyncpa [#allocation6], 1
    %s673 = scalar_lea.sflag [#allocation6], 1
    %674 = vsyncpa %s673, 1
    %675 = vsyncpa [#allocation9], 1
    %s676 = scalar_lea.sflag [#allocation9], 1
    %677 = vsyncpa %s676, 1
    %678 = vsyncpa [#allocation4], 1
    %s679 = scalar_lea.sflag [#allocation4], 1
    %680 = vsyncpa %s679, 1

</llo_original>
